<compile_context>
chip_gen: v7x
topology: tpu7x:2x2x1
jax: 0.10.0
libtpu: 0.0.40
codegen_flags: <defaults>
</compile_context>

<pallas_src>
import jax
import jax.numpy as jnp
from jax import lax
from jax.experimental import pallas as pl
from jax.experimental.pallas import tpu as pltpu


def _round_up(v, m):
    return ((v + m - 1) // m) * m


def _vmem_capacity_bytes():
    """Physical VMEM per TensorCore (generation-aware), with a safe fallback."""
    try:
        return int(pltpu.get_tpu_info().vmem_capacity_bytes)
    except Exception:
        return 64 << 20  # conservative: v7x per-core capacity


def _pick_tile_n(N):
    """Largest multiple-of-128 chunk (<= 2048) that divides round_up(N, 128)."""
    np128 = _round_up(N, 128)
    for cand in (2048, 1024, 512, 256, 128):
        if np128 % cand == 0:
            return cand
    return 512


def _finish_softmax(energy, gamma):
    """gamma * softmax(rowmax(energy) - energy), fused via a single rowmin."""
    e_min = jnp.min(energy, axis=-1, keepdims=True)        # (C, 1)
    p = jnp.exp(e_min - energy)                             # (C, C), values in (0, 1]
    denom = jnp.sum(p, axis=-1, keepdims=True)
    inv = pl.reciprocal(denom, approx=True)                 # EUP reciprocal
    inv = inv * (2.0 - denom * inv)                         # one Newton step -> ~f32
    return p * (inv * gamma)                                # gamma folded in here


# ---------------------------------------------------------------------------
# Resident path: whole (C, N) slab in VMEM, grid over batch only.
# ---------------------------------------------------------------------------
def _cam_resident_kernel(gamma_ref, x_ref, o_ref):
    x = x_ref[0]                                            # (C, Np), input dtype
    # energy = x @ x^T : contract the shared N (lane) axis directly -- no
    # transposed (Np, C) copy.  (Verified previously to lower to a native
    # transposed-operand MXU matmul, no vxpose copy.)
    energy = lax.dot_general(
        x, x, dimension_numbers=(((1,), (1,)), ((), ())),
        preferred_element_type=jnp.float32)                 # (C, C) f32
    gamma = gamma_ref[0].astype(jnp.float32)
    attn = _finish_softmax(energy, gamma)                   # (C, C) f32, gamma-scaled
    out = jnp.dot(attn.astype(x.dtype), x,
                  preferred_element_type=jnp.float32)       # (C, Np) f32
    # Residual add in the output dtype: no f32 copy of x.
    o_ref[0] = out.astype(o_ref.dtype) + x


def _cam_resident(x_flat, gamma, vmem_cap):
    B, C, Np = x_flat.shape
    itemsize = jnp.dtype(x_flat.dtype).itemsize
    sub = (8 * 4) // itemsize                               # sublane pack: f32->8, bf16->16
    Cp = _round_up(C, sub)                                  # Mosaic-internal pad (estimate only)
    budget = (4 * Cp * Np * itemsize                        # double-buffered in + out blocks
              + 2 * Cp * Cp * 4                             # energy + p (f32)
              + Cp * Cp * itemsize                          # cast attention
              + Cp * Np * 4                                 # f32 matmul result
              + (2 << 20))                                  # slack
    vmem_limit = int(min(max(budget, 32 << 20), int(0.85 * vmem_cap)))
    cost = pl.CostEstimate(
        flops=int(4 * B * C * C * Np),
        transcendentals=int(B * C * C),
        bytes_accessed=int(2 * B * C * Np * itemsize))
    return pl.pallas_call(
        _cam_resident_kernel,
        out_shape=jax.ShapeDtypeStruct((B, C, Np), x_flat.dtype),
        grid=(B,),
        in_specs=[
            pl.BlockSpec(memory_space=pltpu.SMEM),                 # gamma scalar
            pl.BlockSpec((1, C, Np), lambda b: (b, 0, 0)),         # per-batch slab
        ],
        out_specs=pl.BlockSpec((1, C, Np), lambda b: (b, 0, 0)),
        compiler_params=pltpu.CompilerParams(
            dimension_semantics=("parallel",),
            vmem_limit_bytes=vmem_limit),
        cost_estimate=cost,
    )(gamma, x_flat)


# ---------------------------------------------------------------------------
# Tiled two-pass path: N-chunked energy accumulation, then streamed apply.
# ---------------------------------------------------------------------------
def _cam_attention_kernel(gamma_ref, x_ref, attn_ref, acc_ref):
    n = pl.program_id(1)

    @pl.when(n == 0)
    def _():
        acc_ref[...] = jnp.zeros_like(acc_ref)

    xc = x_ref[0]                                           # (C, tile_n)
    acc_ref[...] += lax.dot_general(
        xc, xc, dimension_numbers=(((1,), (1,)), ((), ())),
        preferred_element_type=jnp.float32)                 # (C, C) f32

    @pl.when(n == pl.num_programs(1) - 1)
    def _():
        gamma = gamma_ref[0].astype(jnp.float32)
        attn = _finish_softmax(acc_ref[...], gamma)         # gamma-scaled
        attn_ref[0] = attn.astype(attn_ref.dtype)


def _cam_apply_kernel(attn_ref, x_ref, o_ref):
    xc = x_ref[0]                                           # (C, tile_n)
    out = jnp.dot(attn_ref[0], xc, preferred_element_type=jnp.float32)
    o_ref[0] = out.astype(o_ref.dtype) + xc                 # residual in output dtype


def _cam_tiled(x_flat, gamma, tile_n, vmem_cap):
    B, C, Npad = x_flat.shape
    assert tile_n % 128 == 0 and Npad % tile_n == 0
    n_chunks = Npad // tile_n
    itemsize = jnp.dtype(x_flat.dtype).itemsize
    sub = (8 * 4) // itemsize
    Cp = _round_up(C, sub)
    cap = int(0.85 * vmem_cap)

    # Pass 1: accumulate energy over N chunks, finish with the softmax and
    # write the gamma-scaled attention (B, C, C) in the input dtype.
    # TODO(synk): for v7x at B == 1, row-block C here too so both TensorCores
    # share the energy pass (the apply pass below is already fully parallel).
    budget1 = (4 * Cp * tile_n * itemsize                   # double-buffered x chunks
               + 2 * Cp * Cp * itemsize                     # attention output block
               + 2 * Cp * Cp * 4                            # f32 acc scratch + softmax temp
               + (2 << 20))
    attn = pl.pallas_call(
        _cam_attention_kernel,
        out_shape=jax.ShapeDtypeStruct((B, C, C), x_flat.dtype),
        grid=(B, n_chunks),
        in_specs=[
            pl.BlockSpec(memory_space=pltpu.SMEM),
            pl.BlockSpec((1, C, tile_n), lambda b, n: (b, 0, n)),
        ],
        out_specs=pl.BlockSpec((1, C, C), lambda b, n: (b, 0, 0)),
        scratch_shapes=[pltpu.VMEM((C, C), jnp.float32)],
        compiler_params=pltpu.CompilerParams(
            dimension_semantics=("parallel", "arbitrary"),
            vmem_limit_bytes=int(min(max(budget1, 32 << 20), cap))),
        cost_estimate=pl.CostEstimate(
            flops=int(2 * B * C * C * Npad),
            transcendentals=int(B * C * C),
            bytes_accessed=int(B * C * Npad * itemsize + B * C * C * itemsize)),
    )(gamma, x_flat)

    # Pass 2: out = attention @ x + x, streamed in N chunks.  Both grid axes
    # are independent, so v7x's two TensorCores split the work even at B == 1.
    budget2 = (2 * Cp * Cp * itemsize                       # attention block
               + 4 * Cp * tile_n * itemsize                 # x in + out, double-buffered
               + Cp * tile_n * 4                            # f32 matmul result
               + (2 << 20))
    out = pl.pallas_call(
        _cam_apply_kernel,
        out_shape=jax.ShapeDtypeStruct((B, C, Npad), x_flat.dtype),
        grid=(B, n_chunks),
        in_specs=[
            pl.BlockSpec((1, C, C), lambda b, n: (b, 0, 0)),
            pl.BlockSpec((1, C, tile_n), lambda b, n: (b, 0, n)),
        ],
        out_specs=pl.BlockSpec((1, C, tile_n), lambda b, n: (b, 0, n)),
        compiler_params=pltpu.CompilerParams(
            dimension_semantics=("parallel", "parallel"),
            vmem_limit_bytes=int(min(max(budget2, 32 << 20), cap))),
        cost_estimate=pl.CostEstimate(
            flops=int(2 * B * C * C * Npad),
            transcendentals=0,
            bytes_accessed=int(2 * B * C * Npad * itemsize + B * C * C * itemsize)),
    )(attn, x_flat)
    return out


# ---------------------------------------------------------------------------
# Wrapper
# ---------------------------------------------------------------------------
def cam_module_forward(x, gamma, *, force_tiled=False, tile_n=None):
    """x: (B, C, H, W), gamma: (1,) parameter.  Returns (B, C, H, W)."""
    B, C, H, W = x.shape
    N = H * W
    itemsize = jnp.dtype(x.dtype).itemsize
    vmem_cap = _vmem_capacity_bytes()

    # Resident-path VMEM estimate using Mosaic-internal padded dims.
    sub = (8 * 4) // itemsize
    Cp = _round_up(C, sub)
    Np = _round_up(N, 128)
    resident_budget = (4 * Cp * Np * itemsize + 2 * Cp * Cp * 4
                       + Cp * Cp * itemsize + Cp * Np * 4 + (2 << 20))
    use_tiled = force_tiled or resident_budget > int(0.8 * vmem_cap)

    x_flat = x.reshape(B, C, N)
    if not use_tiled:
        # C is never padded (full-dim block); N padded to 128 only if needed,
        # so the common aligned case has zero pad/slice HBM round trips.
        Npad = _round_up(N, 128)
        if Npad != N:
            x_flat = jnp.pad(x_flat, ((0, 0), (0, 0), (0, Npad - N)))
        out = _cam_resident(x_flat, gamma, vmem_cap)
    else:
        if tile_n is None:
            tile_n = _pick_tile_n(N)
        Npad = _round_up(N, tile_n)
        if Npad != N:
            x_flat = jnp.pad(x_flat, ((0, 0), (0, 0), (0, Npad - N)))
        out = _cam_tiled(x_flat, gamma, tile_n, vmem_cap)

    if Npad != N:
        out = out[:, :, :N]
    return out.reshape(B, C, H, W)


def _reference(x, gamma):
    # Pure-JAX reference mirroring the PyTorch forward (f32 compute).
    B, C, H, W = x.shape
    xf = x.reshape(B, C, -1).astype(jnp.float32)
    energy = jnp.einsum("bcn,bdn->bcd", xf, xf)
    energy_new = jnp.max(energy, axis=-1, keepdims=True) - energy
    attention = jax.nn.softmax(energy_new, axis=-1)
    out = jnp.einsum("bcd,bdn->bcn", attention, xf)
    out = out.reshape(B, C, H, W)
    return gamma.astype(jnp.float32)[0] * out + x.astype(jnp.float32)


if __name__ == "__main__":
    key = jax.random.PRNGKey(0)
    B, C, H, W = 2, 4, 16, 16
    x = jax.random.normal(key, (B, C, H, W), dtype=jnp.float32)

    gamma_zero = jnp.zeros((1,), dtype=jnp.float32)   # nn.Parameter(torch.zeros(1))
    gamma_test = jnp.array([0.5], dtype=jnp.float32)

    ref0 = _reference(x, gamma_zero)
    ref1 = _reference(x, gamma_test)

    # Resident path, f32.
    out0 = jax.block_until_ready(cam_module_forward(x, gamma_zero))
    out1 = jax.block_until_ready(cam_module_forward(x, gamma_test))
    assert jnp.allclose(out0, ref0, atol=1e-3, rtol=1e-3), "mismatch (resident f32, gamma=0)"
    assert jnp.allclose(out1, ref1, atol=1e-3, rtol=1e-3), "mismatch (resident f32, gamma=0.5)"

    # Tiled two-pass path (forced, tile_n=128 -> 2 chunks so the energy
    # accumulation across N chunks is actually exercised).
    out_t = jax.block_until_ready(
        cam_module_forward(x, gamma_test, force_tiled=True, tile_n=128))
    assert jnp.allclose(out_t, ref1, atol=1e-3, rtol=1e-3), "mismatch (tiled f32, gamma=0.5)"

    # Unaligned shapes (C not a sublane multiple, N not a 128 multiple).
    x_odd = jax.random.normal(jax.random.PRNGKey(1), (1, 5, 9, 9), dtype=jnp.float32)
    out_odd = jax.block_until_ready(cam_module_forward(x_odd, gamma_test))
    ref_odd = _reference(x_odd, gamma_test)
    assert jnp.allclose(out_odd, ref_odd, atol=1e-3, rtol=1e-3), "mismatch (odd-shape f32)"

    # bf16: MXU consumes bf16 operands with f32 accumulation; output is bf16.
    xb = x.astype(jnp.bfloat16)
    refb = _reference(xb, gamma_test)
    outb = jax.block_until_ready(cam_module_forward(xb, gamma_test))
    assert jnp.allclose(outb.astype(jnp.float32), refb, atol=1e-1, rtol=1e-1), \
        "mismatch (resident bf16)"
    outb_t = jax.block_until_ready(
        cam_module_forward(xb, gamma_test, force_tiled=True, tile_n=128))
    assert jnp.allclose(outb_t.astype(jnp.float32), refb, atol=1e-1, rtol=1e-1), \
        "mismatch (tiled bf16)"

    print("KERNEL_OK")
</pallas_src>

<mosaic_0001>
module attributes {stable_mosaic.version = 11 : i64} {
  func.func @_cam_resident_kernel(%arg0: i32, %arg1: memref<1xf32, #tpu.memory_space<smem>>, %arg2: memref<1x4x256xf32, #tpu.memory_space<vmem>>, %arg3: memref<1x4x256xf32, #tpu.memory_space<vmem>>) attributes {dimension_semantics = [#tpu.dimension_semantics<parallel>], iteration_bounds = array<i64: 2>, scalar_prefetch = 0 : i64, scratch_operands = 0 : i64, tpu.core_type = #tpu.core_type<tc>, window_params = [{transform_indices = @transform_0, window_bounds = array<i64: 1>}, {transform_indices = @transform_1, window_bounds = array<i64: 1, 4, 256>}, {transform_indices = @transform_2, window_bounds = array<i64: 1, 4, 256>}]} {
    %c0 = arith.constant 0 : index
    %c0_0 = arith.constant 0 : index
    %c0_1 = arith.constant 0 : index
    %0 = vector.load %arg2[%c0, %c0_0, %c0_1] : memref<1x4x256xf32, #tpu.memory_space<vmem>>, vector<1x4x256xf32>
    %1 = vector.shape_cast %0 : vector<1x4x256xf32> to vector<4x256xf32>
    %cst = arith.constant dense<0.000000e+00> : vector<4x4xf32>
    %2 = tpu.matmul %1, %1, %cst {dimension_numbers = #tpu.dot_dimension_numbers<[1], [1], [0], [0], [0, 0, 1, 0], [], []>} : vector<4x256xf32>, vector<4x256xf32>, vector<4x4xf32> -> vector<4x4xf32>
    %c0_2 = arith.constant 0 : index
    %3 = memref.load %arg1[%c0_2] : memref<1xf32, #tpu.memory_space<smem>>
    %cst_3 = arith.constant dense<0x7F800000> : vector<4xf32>
    %4 = vector.multi_reduction <minimumf>, %2, %cst_3 [1] : vector<4x4xf32> to vector<4xf32>
    %5 = vector.shape_cast %4 : vector<4xf32> to vector<4x1xf32>
    %6 = vector.broadcast %5 : vector<4x1xf32> to vector<4x4xf32>
    %7 = arith.subf %6, %2 : vector<4x4xf32>
    %8 = math.exp %7 : vector<4x4xf32>
    %cst_4 = arith.constant dense<0.000000e+00> : vector<4xf32>
    %9 = vector.multi_reduction <add>, %8, %cst_4 [1] : vector<4x4xf32> to vector<4xf32>
    %10 = vector.shape_cast %9 : vector<4xf32> to vector<4x1xf32>
    %11 = tpu.reciprocal %10 {approx = true} : vector<4x1xf32> -> vector<4x1xf32>
    %12 = arith.mulf %10, %11 : vector<4x1xf32>
    %cst_5 = arith.constant 2.000000e+00 : f32
    %13 = vector.broadcast %cst_5 : f32 to vector<4x1xf32>
    %14 = arith.subf %13, %12 : vector<4x1xf32>
    %15 = arith.mulf %11, %14 : vector<4x1xf32>
    %16 = vector.broadcast %3 : f32 to vector<4x1xf32>
    %17 = arith.mulf %15, %16 : vector<4x1xf32>
    %18 = vector.broadcast %17 : vector<4x1xf32> to vector<4x4xf32>
    %19 = arith.mulf %8, %18 : vector<4x4xf32>
    %cst_6 = arith.constant dense<0.000000e+00> : vector<4x256xf32>
    %20 = tpu.matmul %19, %1, %cst_6 {dimension_numbers = #tpu.dot_dimension_numbers<[1], [0], [0], [1], [0, 0, 1, 1], [], []>} : vector<4x4xf32>, vector<4x256xf32>, vector<4x256xf32> -> vector<4x256xf32>
    %21 = arith.addf %20, %1 : vector<4x256xf32>
    %c0_7 = arith.constant 0 : index
    %c0_8 = arith.constant 0 : index
    %c0_9 = arith.constant 0 : index
    %22 = vector.load %arg3[%c0_7, %c0_8, %c0_9] : memref<1x4x256xf32, #tpu.memory_space<vmem>>, vector<1x4x256xf32>
    %23 = vector.shape_cast %22 : vector<1x4x256xf32> to vector<4x256xf32>
    %24 = vector.shape_cast %21 : vector<4x256xf32> to vector<1x4x256xf32>
    tpu.vector_store %arg3[%c0_7, %c0_8, %c0_9], %24 {strides = array<i32>} : memref<1x4x256xf32, #tpu.memory_space<vmem>>, vector<1x4x256xf32>,
    return
  }
  func.func @transform_0(%arg0: i32) -> i32 {
    %c0_i32 = arith.constant 0 : i32
    %c0_i32_0 = arith.constant 0 : i32
    return %c0_i32 : i32
  }
  func.func @transform_1(%arg0: i32) -> (i32, i32, i32) {
    %c0_i32 = arith.constant 0 : i32
    %c0_i32_0 = arith.constant 0 : i32
    %c0_i32_1 = arith.constant 0 : i32
    return %arg0, %c0_i32, %c0_i32_0 : i32, i32, i32
  }
  func.func @transform_2(%arg0: i32) -> (i32, i32, i32) {
    %c0_i32 = arith.constant 0 : i32
    %c0_i32_0 = arith.constant 0 : i32
    %c0_i32_1 = arith.constant 0 : i32
    return %arg0, %c0_i32, %c0_i32_0 : i32, i32, i32
  }
}

</mosaic_0001>

<llo_original>
// kernel: tpu_custom_call.1
$region0: #{tpu_custom_call.1}
  #allocation0 [shape = 'u32[]', space=smem, size = 0x4, offset = 0x4, fixed_abs, tag = 'smem constant byte address 0x4 - core index']
  #allocation1 [shape = 'u32[144,128]{1,0:T(1,128)}', space=vmem, size = 0x12000, scoped, tag = 'internal scratch']
  #allocation2 [shape = 'f32[1]{0:T(128)S(6)}', space=smem, size = 0x200, scoped, tag = 'scoped memory for tpu_custom_call.1']
  %s0 = inlined_call_operand.<no memory space> [shape: f32[1], index: 0, kind: input, shape index: {}]
  %s1 = inlined_call_operand.hbm [shape: f32[2,4,256], index: 1, kind: input, shape index: {}]
  %s2 = inlined_call_operand.hbm [shape: f32[2,4,256], index: 2, kind: output, shape index: {}]
  %s3 = sld [smem:[#allocation0]]
  $region45: #{tpu_custom_call.1} parent=0
    _
  %s5 = ssub.s32 1, %s3
  %s6 = scalar_select 0, %s5, %s3
  %7 = sst [smem:[#allocation2]] %s0
  $region1: #{tpu_custom_call.1} parent=0
    #allocation3 [shape = 'u8[8192]{0}', space=vmem, size = 0x2000, scoped, tag = 'input window, operand 1']
    #allocation4 [shape = 's32[2]{0}', space=sflag, size = 0x8, scoped, tag = 'scoped memory for tpu_custom_call.1']
    #allocation5 [shape = 's32[2]{0}', space=sflag, size = 0x8, scoped, tag = 'scoped memory for tpu_custom_call.1']
    #allocation6 [shape = 'u8[8192]{0}', space=vmem, size = 0x2000, scoped, tag = 'output window, operand 0']
    %8 = vsyncpa [#allocation4], 0
    %s9 = scalar_lea.sflag [#allocation4], 1
    %10 = vsyncpa %s9, 0
    %11 = vsyncpa [#allocation5], 0
    %s12 = scalar_lea.sflag [#allocation5], 1
    %13 = vsyncpa %s12, 0
    loop: start=0, step=1, limit=4
    $region2: #{tpu_custom_call.1} parent=1 // loop_pre_header
      _
    $region3: #{tpu_custom_call.1} parent=1 // loop_header
      %s15 = sphi 0, %s19
      %p16 = scmp.ge.s32.totalorder %s15, 4
      %s23 = sphi 0, %s23
      %s25 = sphi 0, %s23
      %s26 = sphi 0, %s25
      %s40 = sphi 0, %s26
      %s46 = sphi 0, %s48
      %s49 = sphi 0, %s46
      %s50 = sphi 0, %s49
      %s66 = sphi 0, %s50
      %s72 = sphi 0, %s74
      %s75 = sphi 0, %s72
      %s76 = sphi 0, %s75
      %s92 = sphi 0, %s76
    $region4: #{tpu_custom_call.1} parent=1 // loop_header_branch
      %18 = sbr.rel (%p16) target = $region8
    $region5: #{tpu_custom_call.1} parent=1 // loop_body
      %s20 = ssub.s32 %s15, 1
      %s21 = ssub.s32 %s15, 2
      %s22 = sadd.s32 %s15, 1
      %s24 = sadd.s32 %s23, 1
      %p27 = scmp.eq.s32.totalorder %s15, 1
      %p28 = scmp.ne.s32.totalorder %s23, %s25
      %p29 = scmp.eq.s32.totalorder %s15, 0
      %p30 = por %p28, %p29
      %p31 = scmp.ne.s32.totalorder %s23, %s25
      %p32 = scmp.eq.s32.totalorder %s20, 1
      %p33 = por %p31, %p32
      %p34 = scmp.ne.s32.totalorder %s25, %s26
      %p35 = scmp.eq.s32.totalorder %s20, 0
      %p36 = por %p34, %p35
      %p37 = scmp.ne.s32.totalorder %s25, %s26
      %p38 = scmp.eq.s32.totalorder %s21, 1
      %p39 = por %p37, %p38
      %p41 = scmp.ne.s32.totalorder %s26, %s40
      %p42 = scmp.eq.s32.totalorder %s21, 0
      %p43 = por %p41, %p42
      %s44 = ssub.s32 %s15, %s22
      %p45 = scmp.eq.s32.totalorder %s44, 0
      %s47 = sadd.s32 %s46, 1
      %s48 = scalar_select %p45, %s46, %s47
      %p51 = pneg %p45
      %p52 = scmp.eq.s32.totalorder %s15, 1
      %p53 = por %p51, %p52
      %p54 = scmp.ne.s32.totalorder %s46, %s49
      %p55 = scmp.eq.s32.totalorder %s15, 0
      %p56 = por %p54, %p55
      %p57 = scmp.ne.s32.totalorder %s46, %s49
      %p58 = scmp.eq.s32.totalorder %s20, 1
      %p59 = por %p57, %p58
      %p60 = scmp.ne.s32.totalorder %s49, %s50
      %p61 = scmp.eq.s32.totalorder %s20, 0
      %p62 = por %p60, %p61
      %p63 = scmp.ne.s32.totalorder %s49, %s50
      %p64 = scmp.eq.s32.totalorder %s21, 1
      %p65 = por %p63, %p64
      %p67 = scmp.ne.s32.totalorder %s50, %s66
      %p68 = scmp.eq.s32.totalorder %s21, 0
      %p69 = por %p67, %p68
      %s70 = ssub.s32 %s15, %s22
      %p71 = scmp.eq.s32.totalorder %s70, 0
      %s73 = sadd.s32 %s72, 1
      %s74 = scalar_select %p71, %s72, %s73
      %p77 = pneg %p71
      %p78 = scmp.eq.s32.totalorder %s15, 1
      %p79 = por %p77, %p78
      %p80 = scmp.ne.s32.totalorder %s72, %s75
      %p81 = scmp.eq.s32.totalorder %s15, 0
      %p82 = por %p80, %p81
      %p83 = scmp.ne.s32.totalorder %s72, %s75
      %p84 = scmp.eq.s32.totalorder %s20, 1
      %p85 = por %p83, %p84
      %p86 = scmp.ne.s32.totalorder %s75, %s76
      %p87 = scmp.eq.s32.totalorder %s20, 0
      %p88 = por %p86, %p87
      %p89 = scmp.ne.s32.totalorder %s75, %s76
      %p90 = scmp.eq.s32.totalorder %s21, 1
      %p91 = por %p89, %p90
      %p93 = scmp.ne.s32.totalorder %s76, %s92
      %p94 = scmp.eq.s32.totalorder %s21, 0
      %p95 = por %p93, %p94
      %p96 = scmp.le.s32.totalorder 1, %s15
      %p97 = scmp.lt.s32.totalorder %s15, 3
      %p98 = pnand %p96, %p97
      %p99 = pneg %p98
      // Predicated region
      $region9: #{tpu_custom_call.1} parent=5 // pred_check
        _
      $region10: #{tpu_custom_call.1} parent=5 // pred_check_branch
        %101 = sbr.rel (%p98) target = $region12
      $region11: #{tpu_custom_call.1} parent=5 // pred_region
        %s102 = ssub.s32 %s15, 1
        // Predicated region
        $region13: #{tpu_custom_call.1} parent=11 // pred_check
          %p103 = pneg %p36
        $region14: #{tpu_custom_call.1} parent=11 // pred_check_branch
          %105 = sbr.rel (%p103) target = $region16
        $region15: #{tpu_custom_call.1} parent=11 // pred_region
          _
        $region16: #{tpu_custom_call.1} parent=11 // pred_fallthru
          _
      $region12: #{tpu_custom_call.1} parent=5 // pred_fallthru
        _
      %p106 = scmp.lt.s32.totalorder %s15, 2
      // Predicated region
      $region17: #{tpu_custom_call.1} parent=5 // pred_check
        %p107 = pneg %p106
      $region18: #{tpu_custom_call.1} parent=5 // pred_check_branch
        %109 = sbr.rel (%p107) target = $region20
      $region19: #{tpu_custom_call.1} parent=5 // pred_region
        // Predicated region
        $region21: #{tpu_custom_call.1} parent=19 // pred_check
          %p110 = pneg %p56
        $region22: #{tpu_custom_call.1} parent=19 // pred_check_branch
          %112 = sbr.rel (%p110) target = $region24
        $region23: #{tpu_custom_call.1} parent=19 // pred_region
          %s113 = sand.u32 %s46, 1
          %s114 = scalar_lea.sflag [#allocation4], %s113
          %s115 = sand.u32 %s46, 1
          %s116 = smul.addr %s115, 8
          %s117 = scalar_lea.vmem [#allocation3], %s116
          %s119 = ssub.s32 128, 128
          %120 = vsyncadd %s114, %s119
          %s121 = smul.addr %s15, 2
          %s122 = smul.addr %s121, 64
          %s123 = scalar_lea.hbm %s1, %s122
          %s125 = sshll.u32 %s117, 4
          %s126 = int_to_ptr.vmem [resolvable:$true] %s125
          %128 = dma.hbm_to_vmem [thread:$0]  %s123, 128, %s126, %s114
        $region24: #{tpu_custom_call.1} parent=19 // pred_fallthru
          _
      $region20: #{tpu_custom_call.1} parent=5 // pred_fallthru
        _
      %p129 = scmp.le.s32.totalorder 1, %s15
      %p130 = scmp.lt.s32.totalorder %s15, 3
      %p131 = pnand %p129, %p130
      %p132 = pneg %p131
      // Predicated region
      $region25: #{tpu_custom_call.1} parent=5 // pred_check
        _
      $region26: #{tpu_custom_call.1} parent=5 // pred_check_branch
        %134 = sbr.rel (%p131) target = $region28
      $region27: #{tpu_custom_call.1} parent=5 // pred_region
        %s135 = ssub.s32 %s15, 1
        %s136 = sand.u32 %s49, 1
        %s137 = scalar_lea.sflag [#allocation4], %s136
        %s138 = sand.u32 %s49, 1
        %s139 = smul.addr %s138, 8
        %s140 = scalar_lea.vmem [#allocation3], %s139
        // Predicated region
        $region29: #{tpu_custom_call.1} parent=27 // pred_check
          %p141 = pneg %p62
        $region30: #{tpu_custom_call.1} parent=27 // pred_check_branch
          %143 = sbr.rel (%p141) target = $region32
        $region31: #{tpu_custom_call.1} parent=27 // pred_region
          %144 = dma.done %s137, 128
        $region32: #{tpu_custom_call.1} parent=27 // pred_fallthru
          _
        %p145 = pneg %p36
        %p146 = pneg %p33
        %s147 = sand.u32 %s49, 1
        %s148 = scalar_lea.sflag [#allocation4], %s147
        %s149 = sand.u32 %s49, 1
        %s150 = smul.addr %s149, 8
        %s151 = scalar_lea.vmem [#allocation3], %s150
        %p152 = pneg %p62
        %p153 = pneg %p59
        %p154 = pneg %p88
        %p155 = pneg %p85
        %s156 = sand.u32 %s75, 1
        %s157 = scalar_lea.sflag [#allocation5], %s156
        %s158 = sand.u32 %s75, 1
        %s159 = smul.addr %s158, 8
        %s160 = scalar_lea.vmem [#allocation6], %s159
        %v161 = vld [vmem:[%s140] sm:$0xff]
        %v163 = vcombine.high %v161, %v161
        %165 = vmatprep.subr.mxu0 %v163
        %166 = vmatpush1.xpose.msra.mxu0 %v161
        %167 = vmatprep.subr.mxu0 0.0
        %168 = vmatpush1.xpose.msra.mxu0 0.0
        %169 = vmatprep.subr.mxu0 0.0
        %170 = vmatpush1.xpose.msra.mxu0 0.0
        %171 = vmatprep.subr.mxu0 0.0
        %172 = vmatpush1.xpose.msra.mxu0 0.0
        %173 = vmatprep.subr.mxu0 0.0
        %174 = vmatpush1.xpose.msra.mxu0 0.0
        %175 = vmatprep.subr.mxu0 0.0
        %176 = vmatpush1.xpose.msra.mxu0 0.0
        %177 = vmatprep.subr.mxu0 0.0
        %178 = vmatpush1.xpose.msra.mxu0 0.0
        %179 = vmatprep.subr.mxu0 0.0
        %180 = vmatpush1.xpose.msra.mxu0 0.0
        %181 = vmatprep.subr.mxu0 0.0
        %182 = vmatpush1.xpose.msra.mxu0 0.0
        %183 = vmatprep.subr.mxu0 0.0
        %184 = vmatpush1.xpose.msra.mxu0 0.0
        %185 = vmatprep.subr.mxu0 0.0
        %186 = vmatpush1.xpose.msra.mxu0 0.0
        %187 = vmatprep.subr.mxu0 0.0
        %188 = vmatpush1.xpose.msra.mxu0 0.0
        %189 = vmatprep.subr.mxu0 0.0
        %190 = vmatpush1.xpose.msra.mxu0 0.0
        %191 = vmatprep.subr.mxu0 0.0
        %192 = vmatpush1.xpose.msra.mxu0 0.0
        %193 = vmatprep.subr.mxu0 0.0
        %194 = vmatpush1.xpose.msra.mxu0 0.0
        %195 = vmatprep.subr.mxu0 0.0
        %196 = vmatpush1.xpose.msra.mxu0 0.0
        %197 = vmatprep.subr.mxu0 0.0
        %198 = vmatpush1.xpose.msra.mxu0 0.0
        %199 = vmatprep.subr.mxu0 0.0
        %200 = vmatpush1.xpose.msra.mxu0 0.0
        %201 = vmatprep.subr.mxu0 0.0
        %202 = vmatpush1.xpose.msra.mxu0 0.0
        %203 = vmatprep.subr.mxu0 0.0
        %204 = vmatpush1.xpose.msra.mxu0 0.0
        %205 = vmatprep.subr.mxu0 0.0
        %206 = vmatpush1.xpose.msra.mxu0 0.0
        %207 = vmatprep.subr.mxu0 0.0
        %208 = vmatpush1.xpose.msra.mxu0 0.0
        %209 = vmatprep.subr.mxu0 0.0
        %210 = vmatpush1.xpose.msra.mxu0 0.0
        %211 = vmatprep.subr.mxu0 0.0
        %212 = vmatpush1.xpose.msra.mxu0 0.0
        %213 = vmatprep.subr.mxu0 0.0
        %214 = vmatpush1.xpose.msra.mxu0 0.0
        %215 = vmatprep.subr.mxu0 0.0
        %216 = vmatpush1.xpose.msra.mxu0 0.0
        %217 = vmatprep.subr.mxu0 0.0
        %218 = vmatpush1.xpose.msra.mxu0 0.0
        %219 = vmatprep.subr.mxu0 0.0
        %220 = vmatpush1.xpose.msra.mxu0 0.0
        %221 = vmatprep.subr.mxu0 0.0
        %222 = vmatpush1.xpose.msra.mxu0 0.0
        %223 = vmatprep.subr.mxu0 0.0
        %224 = vmatpush1.xpose.msra.mxu0 0.0
        %225 = vmatprep.subr.mxu0 0.0
        %226 = vmatpush1.xpose.msra.mxu0 0.0
        %227 = vmatprep.subr.mxu0 0.0
        %228 = vmatpush1.xpose.msra.mxu0 0.0
        %229 = vmatprep.mubr.f32.mxu0 %v163
        %230 = vmatmul.mubr.f32.gmra.mrb[0].mxu0 %v161
        %v231 = vpop.f32.mrb[0].mxu0
        %v232 = vadd.f32 0.0, %v231
        %v233 = vpop.f32.mrb[0].mxu0
        %234 = vdwg.mxu0
        %s235 = sld [smem:[#allocation2]]
        %vm236 = vcmask 27648
        %v237 = vsel %vm236, %v232, inf
        %238 = vmin.xlane.f32.xlu0 %v237
        %v239 = vpop.xlane.xlu0 %238
        %v240 = vsub.f32 %v239, %v232
        %v241 = vmul.f32 %v240, 1.442695
        %v242 = vpow.pop %v241
        %v243 = vsel %vm236, %v242, 0.0
        %244 = vadd.xlane.f32.xlu0 %v243
        %v245 = vpop.xlane.xlu0 %244
        %v246 = vrcp.pop %v245
        %v247 = vmul.f32 %v245, %v246
        %v248 = vsub.f32 2.0, %v247
        %v249 = vmul.f32 %v246, %v248
        %v250 = vstv %s235
        %v251 = vmul.f32 %v249, %v250
        %v252 = vmul.f32 %v242, %v251
        %vm253 = vcmask 31744
        %v255 = vsel %vm253, %v252, 0
        %vm257 = vcmask 1043456
        %v258 = vsel %vm257, %v161, 0
        %v260 = vsel %vm257, %v163, 0
        %262 = vmatprep.subr.mxu0 %v260
        %263 = vmatpush1.msra.mxu0 %v258
        %264 = vmatprep.subr.mxu0 0.0
        %265 = vmatpush1.msra.mxu0 0.0
        %266 = vmatprep.subr.mxu0 0.0
        %267 = vmatpush1.msra.mxu0 0.0
        %268 = vmatprep.subr.mxu0 0.0
        %269 = vmatpush1.msra.mxu0 0.0
        %270 = vmatprep.subr.mxu0 0.0
        %271 = vmatpush1.msra.mxu0 0.0
        %272 = vmatprep.subr.mxu0 0.0
        %273 = vmatpush1.msra.mxu0 0.0
        %274 = vmatprep.subr.mxu0 0.0
        %275 = vmatpush1.msra.mxu0 0.0
        %276 = vmatprep.subr.mxu0 0.0
        %277 = vmatpush1.msra.mxu0 0.0
        %278 = vmatprep.subr.mxu0 0.0
        %279 = vmatpush1.msra.mxu0 0.0
        %280 = vmatprep.subr.mxu0 0.0
        %281 = vmatpush1.msra.mxu0 0.0
        %282 = vmatprep.subr.mxu0 0.0
        %283 = vmatpush1.msra.mxu0 0.0
        %284 = vmatprep.subr.mxu0 0.0
        %285 = vmatpush1.msra.mxu0 0.0
        %286 = vmatprep.subr.mxu0 0.0
        %287 = vmatpush1.msra.mxu0 0.0
        %288 = vmatprep.subr.mxu0 0.0
        %289 = vmatpush1.msra.mxu0 0.0
        %290 = vmatprep.subr.mxu0 0.0
        %291 = vmatpush1.msra.mxu0 0.0
        %292 = vmatprep.subr.mxu0 0.0
        %293 = vmatpush1.msra.mxu0 0.0
        %294 = vmatprep.subr.mxu0 0.0
        %295 = vmatpush1.msra.mxu0 0.0
        %296 = vmatprep.subr.mxu0 0.0
        %297 = vmatpush1.msra.mxu0 0.0
        %298 = vmatprep.subr.mxu0 0.0
        %299 = vmatpush1.msra.mxu0 0.0
        %300 = vmatprep.subr.mxu0 0.0
        %301 = vmatpush1.msra.mxu0 0.0
        %302 = vmatprep.subr.mxu0 0.0
        %303 = vmatpush1.msra.mxu0 0.0
        %304 = vmatprep.subr.mxu0 0.0
        %305 = vmatpush1.msra.mxu0 0.0
        %306 = vmatprep.subr.mxu0 0.0
        %307 = vmatpush1.msra.mxu0 0.0
        %308 = vmatprep.subr.mxu0 0.0
        %309 = vmatpush1.msra.mxu0 0.0
        %310 = vmatprep.subr.mxu0 0.0
        %311 = vmatpush1.msra.mxu0 0.0
        %312 = vmatprep.subr.mxu0 0.0
        %313 = vmatpush1.msra.mxu0 0.0
        %314 = vmatprep.subr.mxu0 0.0
        %315 = vmatpush1.msra.mxu0 0.0
        %316 = vmatprep.subr.mxu0 0.0
        %317 = vmatpush1.msra.mxu0 0.0
        %318 = vmatprep.subr.mxu0 0.0
        %319 = vmatpush1.msra.mxu0 0.0
        %320 = vmatprep.subr.mxu0 0.0
        %321 = vmatpush1.msra.mxu0 0.0
        %322 = vmatprep.subr.mxu0 0.0
        %323 = vmatpush1.msra.mxu0 0.0
        %324 = vmatprep.subr.mxu0 0.0
        %325 = vmatpush1.msra.mxu0 0.0
        %326 = vmatprep.mubr.f32.mxu0 0.0
        %327 = vmatmul.mubr.f32.gmra.mrb[0].mxu0 %v255
        %v328 = vpop.f32.mrb[0].mxu0
        %v329 = vadd.f32 %v161, %v328
        %v330 = vpop.f32.mrb[0].mxu0
        %v331 = vadd.f32 %v163, %v330
        %332 = vdwg.mxu0
        %v335 = vcombine.low %v329, %v331
        %337 = vst [vmem:[%s160] sm:$0xff] %v335
        %s338 = sand.u32 %s75, 1
        %s339 = scalar_lea.sflag [#allocation5], %s338
        %s340 = sand.u32 %s75, 1
        %s341 = smul.addr %s340, 8
        %s342 = scalar_lea.vmem [#allocation6], %s341
        // Predicated region
        $region33: #{tpu_custom_call.1} parent=27 // pred_check
          %p343 = pneg %p85
        $region34: #{tpu_custom_call.1} parent=27 // pred_check_branch
          %345 = sbr.rel (%p343) target = $region36
        $region35: #{tpu_custom_call.1} parent=27 // pred_region
          %s347 = ssub.s32 128, 128
          %348 = vsyncadd %s339, %s347
          %s349 = smul.addr %s20, 2
          %s350 = smul.addr %s349, 64
          %s351 = scalar_lea.hbm %s2, %s350
          %s353 = sshll.u32 %s342, 4
          %s354 = int_to_ptr.vmem [resolvable:$true] %s353
          %356 = dma.vmem_to_hbm [thread:$0]  %s354, 128, %s351, %s339
        $region36: #{tpu_custom_call.1} parent=27 // pred_fallthru
          _
      $region28: #{tpu_custom_call.1} parent=5 // pred_fallthru
        _
      %p357 = scmp.le.s32.totalorder 2, %s15
      // Predicated region
      $region37: #{tpu_custom_call.1} parent=5 // pred_check
        %p358 = pneg %p357
      $region38: #{tpu_custom_call.1} parent=5 // pred_check_branch
        %360 = sbr.rel (%p358) target = $region40
      $region39: #{tpu_custom_call.1} parent=5 // pred_region
        %s361 = ssub.s32 %s15, 2
        // Predicated region
        $region41: #{tpu_custom_call.1} parent=39 // pred_check
          %p362 = pneg %p91
        $region42: #{tpu_custom_call.1} parent=39 // pred_check_branch
          %364 = sbr.rel (%p362) target = $region44
        $region43: #{tpu_custom_call.1} parent=39 // pred_region
          %s365 = sand.u32 %s76, 1
          %s366 = scalar_lea.sflag [#allocation5], %s365
          %s367 = sand.u32 %s76, 1
          %s368 = smul.addr %s367, 8
          %s369 = scalar_lea.vmem [#allocation6], %s368
          %370 = dma.done %s366, 128
        $region44: #{tpu_custom_call.1} parent=39 // pred_fallthru
          _
      $region40: #{tpu_custom_call.1} parent=5 // pred_fallthru
        _
    $region6: #{tpu_custom_call.1} parent=1 // loop_footer
      %s19 = sadd.s32 1, %s15
    $region7: #{tpu_custom_call.1} parent=1 // loop_footer_branch
      %14 = sbr.rel target = $region3
    $region8: #{tpu_custom_call.1} parent=1 // loop_exit
      _
    %371 = vsyncpa [#allocation4], 1
    %s372 = scalar_lea.sflag [#allocation4], 1
    %373 = vsyncpa %s372, 1
    %374 = vsyncpa [#allocation5], 1
    %s375 = scalar_lea.sflag [#allocation5], 1
    %376 = vsyncpa %s375, 1

</llo_original>
